<compile_context>
chip_gen: v7x
topology: tpu7x:2x2x1
jax: 0.10.0
libtpu: 0.0.40
codegen_flags: <defaults>
</compile_context>

<pallas_src>
import functools

import jax
import jax.numpy as jnp
from jax.experimental import pallas as pl
from jax.experimental.pallas import tpu as pltpu

LATENT_SIZE = 32
MASK_PROB = 0.15
RAW_WITH_POS = False


# ----------------------------- Pallas kernel ------------------------------- #

def _embed_add_kernel(feat_ref, base_ref, w1_ref, b1_ref, w2_ref, b2_ref,
                      out_ref):
    """out = base + (relu(feat @ W1 + b1) @ W2 + b2), row-packed layout.

    feat : (T, PACK*K)  f32    packed small features (K=3 for pos, 1 for dist)
    base : (T, PACK*L)  f32    packed x / edge_attr
    W1   : (PACK*K, PACK*L) f32   block-diagonal first Linear
    W2   : (PACK*L, PACK*L) bf16  block-diagonal second Linear
    b1,b2: (1, PACK*L)  f32    tiled biases
    """
    # Layer 1 on the MXU: tiny-K f32 matmul is free filler under the HBM
    # roofline and keeps VALU/XLU/ld-st slots clear (no unrolled broadcasts).
    h = jnp.dot(feat_ref[...], w1_ref[...], preferred_element_type=jnp.float32)
    h = jnp.maximum(h + b1_ref[...], 0.0)
    # Layer 2 on the MXU: bf16 x bf16 -> f32 accumulation (W2 is block-diag
    # inflated 4x; bf16 cuts its MXU pass count ~3-4x, which matters on v7x).
    y = jnp.dot(h.astype(jnp.bfloat16), w2_ref[...],
                preferred_element_type=jnp.float32)
    out_ref[...] = (base_ref[...] + (y + b2_ref[...])).astype(out_ref.dtype)


# ----------------------- generation-aware tiling --------------------------- #

def _tpu_tile_config():
    """(desired packed-row tile, tensorcores-per-chip) by TPU generation."""
    try:
        kind = jax.devices()[0].device_kind.lower()
    except Exception:
        kind = ""
    if "v5e" in kind or "v5 lite" in kind or "v5lite" in kind:
        return 4096, 1          # ~13 MiB/step, fits v5e's 16 MiB scoped default
    if "v6" in kind:
        return 8192, 1          # ~17 MiB/step, well under v6e 32 MiB default
    if "7" in kind:
        return 4096, 2          # v7x: 64 MiB VMEM/TC, keep grid long for 2 TCs
    return 4096, 1


def _choose_tile(rows_p, desired_p, n_cores, min_steps_per_core=4):
    target = desired_p
    if n_cores > 1:
        # Keep enough grid steps so the "parallel" axis shards across all TCs.
        target = min(target, max(8, pl.cdiv(rows_p, n_cores * min_steps_per_core)))
    if rows_p <= target:
        return rows_p                       # single full-array block
    return max(8, (target // 8) * 8)        # multiple of 8; ragged tail is OK


def _embed_add(feat_p, base_p, w1b, b1t, w2b, b2t):
    rows_p, lanes = base_p.shape
    kp = feat_p.shape[1]
    desired_p, n_cores = _tpu_tile_config()
    tile_p = _choose_tile(rows_p, desired_p, n_cores)

    def row_spec(width):
        return pl.BlockSpec((tile_p, width), lambda i: (i, 0))

    def const_spec(arr):                     # weights stay resident across grid
        return pl.BlockSpec(arr.shape, lambda i: (0, 0))

    weight_bytes = (w1b.size + b1t.size + b2t.size) * 4 + w2b.size * 2
    block_bytes = tile_p * (kp + 2 * lanes) * 4          # feat + base + out
    vmem_limit = min(max(int(2.5 * block_bytes) + weight_bytes + (2 << 20),
                         24 << 20), 48 << 20)

    flops = rows_p * (2 * kp * lanes + 2 * lanes * lanes + 3 * lanes)
    bytes_accessed = rows_p * (kp + 2 * lanes) * 4 + weight_bytes

    return pl.pallas_call(
        _embed_add_kernel,
        out_shape=jax.ShapeDtypeStruct((rows_p, lanes), base_p.dtype),
        grid=(pl.cdiv(rows_p, tile_p),),
        in_specs=[row_spec(kp), row_spec(lanes),
                  const_spec(w1b), const_spec(b1t),
                  const_spec(w2b), const_spec(b2t)],
        out_specs=row_spec(lanes),
        compiler_params=pltpu.CompilerParams(
            dimension_semantics=("parallel",),
            vmem_limit_bytes=vmem_limit),
        cost_estimate=pl.CostEstimate(flops=flops, transcendentals=0,
                                      bytes_accessed=bytes_accessed),
    )(feat_p, base_p, w1b, b1t, w2b, b2t)


# ------------------------------ JAX wrapper -------------------------------- #

def _mlp_embed_add(feat, base, w1, b1, w2, b2):
    """Row-wise out = base + MLP(feat).  Pack-aligned prefix goes through the
    Pallas kernel with zero padding/slicing copies; the <pack tail rows (if
    any) go through a tiny exact-f32 XLA epilogue."""
    n, latent = base.shape
    k = feat.shape[1]
    pack = 128 // latent if (latent <= 128 and 128 % latent == 0) else 1
    n_main = (n // pack) * pack

    tail = None
    if n_main < n:
        f_t, b_t = feat[n_main:], base[n_main:]
        tail = b_t + (jnp.maximum(f_t @ w1 + b1, 0.0) @ w2 + b2)
    if n_main == 0:
        return tail

    # Expand MLP params once to block-diagonal / tiled form; W2 in bf16.
    eye = jnp.eye(pack, dtype=w1.dtype)
    w1b = jnp.kron(eye, w1)
    b1t = jnp.tile(b1, (1, pack))
    w2b = jnp.kron(eye, w2).astype(jnp.bfloat16)
    b2t = jnp.tile(b2, (1, pack))

    rows_p = n_main // pack
    # Free row-major reshape (bitcast) when n_main == n; only the rare
    # unaligned case pays a prefix-slice copy (still cheaper than pad+slice).
    feat_m = feat if n_main == n else feat[:n_main]
    base_m = base if n_main == n else base[:n_main]
    feat_p = feat_m.reshape(rows_p, pack * k)
    base_p = base_m.reshape(rows_p, pack * latent)

    out = _embed_add(feat_p, base_p, w1b, b1t, w2b, b2t).reshape(n_main, latent)
    if tail is None:
        return out
    return jnp.concatenate([out, tail], axis=0)


def init_params(key, latent=LATENT_SIZE, dtype=jnp.float32):
    ks = jax.random.split(key, 4)

    def lin(k, fan_in, fan_out):
        bound = 1.0 / jnp.sqrt(fan_in)
        kw, kb = jax.random.split(k)
        w = jax.random.uniform(kw, (fan_in, fan_out), dtype, -bound, bound)
        b = jax.random.uniform(kb, (1, fan_out), dtype, -bound, bound)
        return w, b

    pw1, pb1 = lin(ks[0], 3, latent)
    pw2, pb2 = lin(ks[1], latent, latent)
    dw1, db1 = lin(ks[2], 1, latent)
    dw2, db2 = lin(ks[3], latent, latent)
    return dict(pos=(pw1, pb1, pw2, pb2), dis=(dw1, db1, dw2, db2))


@functools.partial(jax.jit, static_argnames=("mode",))
def pos_embedding_with_mask(params, pos, x, edge_attr, edge_index,
                            last_pred=None, mask_idx=None, mode="mask"):
    # Mode selection (cheap elementwise glue, matches the PyTorch forward).
    if mode == "mask":
        pos = jnp.where(mask_idx, last_pred, pos)
    elif mode == "mol2conf":
        pos = last_pred
    elif mode in ("conf2mol", "ff"):
        pos = pos
    elif mode == "raw":
        pos = pos if RAW_WITH_POS else last_pred

    # Data-dependent gather + per-edge distance stays in XLA (fused with the
    # gather), so only an (E, 1) length feature reaches the kernel.
    row, col = edge_index[0], edge_index[1]
    diff = pos[row] - pos[col]
    length = jnp.sqrt(jnp.sum(diff * diff, axis=-1, keepdims=True))   # (E, 1)

    pw1, pb1, pw2, pb2 = params["pos"]
    dw1, db1, dw2, db2 = params["dis"]
    ext_x = _mlp_embed_add(pos, x, pw1, pb1, pw2, pb2)
    ext_ea = _mlp_embed_add(length, edge_attr, dw1, db1, dw2, db2)
    return ext_x, ext_ea


# --------------------------------- main ------------------------------------ #

if __name__ == "__main__":
    key = jax.random.PRNGKey(0)
    k_param, k_pos, k_x, k_ea, k_ei, k_lp, k_mask = jax.random.split(key, 7)

    # N is pack-aligned (zero-copy fast path); E=77 exercises the tail epilogue
    # and a ragged last grid block.
    N, E, L = 64, 77, LATENT_SIZE
    params = init_params(k_param, L)

    pos = jax.random.normal(k_pos, (N, 3), jnp.float32)
    x = jax.random.normal(k_x, (N, L), jnp.float32)
    edge_attr = jax.random.normal(k_ea, (E, L), jnp.float32)
    edge_index = jax.random.randint(k_ei, (2, E), 0, N, jnp.int32)
    last_pred = jax.random.normal(k_lp, (N, 3), jnp.float32)
    mask_idx = jax.random.uniform(k_mask, (N, 1)) < MASK_PROB

    ext_x, ext_ea = pos_embedding_with_mask(
        params, pos, x, edge_attr, edge_index,
        last_pred=last_pred, mask_idx=mask_idx, mode="mask")
    jax.block_until_ready((ext_x, ext_ea))

    # Pure-JAX f32 reference (kernel uses bf16 W2 matmul -> looser tolerance).
    pos_m = jnp.where(mask_idx, last_pred, pos)
    pw1, pb1, pw2, pb2 = params["pos"]
    dw1, db1, dw2, db2 = params["dis"]
    ref_x = x + (jnp.maximum(pos_m @ pw1 + pb1, 0) @ pw2 + pb2)
    diff = pos_m[edge_index[0]] - pos_m[edge_index[1]]
    length = jnp.linalg.norm(diff, axis=-1, keepdims=True)
    ref_ea = edge_attr + (jnp.maximum(length @ dw1 + db1, 0) @ dw2 + db2)

    assert ext_x.shape == (N, L) and ext_ea.shape == (E, L)
    assert jnp.allclose(ext_x, ref_x, atol=2e-2, rtol=2e-2)
    assert jnp.allclose(ext_ea, ref_ea, atol=2e-2, rtol=2e-2)

    print("KERNEL_OK")
</pallas_src>

<mosaic_0001>
module attributes {stable_mosaic.version = 11 : i64} {
  func.func @_embed_add_kernel(%arg0: i32, %arg1: memref<19x4xf32, #tpu.memory_space<vmem>>, %arg2: memref<19x128xf32, #tpu.memory_space<vmem>>, %arg3: memref<4x128xf32, #tpu.memory_space<vmem>>, %arg4: memref<1x128xf32, #tpu.memory_space<vmem>>, %arg5: memref<128x128xbf16, #tpu.memory_space<vmem>>, %arg6: memref<1x128xf32, #tpu.memory_space<vmem>>, %arg7: memref<19x128xf32, #tpu.memory_space<vmem>>) attributes {dimension_semantics = [#tpu.dimension_semantics<parallel>], iteration_bounds = array<i64: 1>, scalar_prefetch = 0 : i64, scratch_operands = 0 : i64, tpu.core_type = #tpu.core_type<tc>, window_params = [{transform_indices = @transform_0, window_bounds = array<i64: 19, 4>}, {transform_indices = @transform_1, window_bounds = array<i64: 19, 128>}, {pipeline_mode = #tpu.pipeline_mode<synchronous>, transform_indices = @transform_2, window_bounds = array<i64: 4, 128>}, {pipeline_mode = #tpu.pipeline_mode<synchronous>, transform_indices = @transform_3, window_bounds = array<i64: 1, 128>}, {pipeline_mode = #tpu.pipeline_mode<synchronous>, transform_indices = @transform_4, window_bounds = array<i64: 128, 128>}, {pipeline_mode = #tpu.pipeline_mode<synchronous>, transform_indices = @transform_5, window_bounds = array<i64: 1, 128>}, {transform_indices = @transform_6, window_bounds = array<i64: 19, 128>}]} {
    %c0 = arith.constant 0 : index
    %c0_0 = arith.constant 0 : index
    %0 = vector.load %arg1[%c0, %c0_0] : memref<19x4xf32, #tpu.memory_space<vmem>>, vector<19x4xf32>
    %c0_1 = arith.constant 0 : index
    %c0_2 = arith.constant 0 : index
    %1 = vector.load %arg3[%c0_1, %c0_2] : memref<4x128xf32, #tpu.memory_space<vmem>>, vector<4x128xf32>
    %cst = arith.constant dense<0.000000e+00> : vector<19x128xf32>
    %2 = tpu.matmul %0, %1, %cst {dimension_numbers = #tpu.dot_dimension_numbers<[1], [0], [0], [1], [0, 0, 1, 1], [], []>} : vector<19x4xf32>, vector<4x128xf32>, vector<19x128xf32> -> vector<19x128xf32>
    %c0_3 = arith.constant 0 : index
    %c0_4 = arith.constant 0 : index
    %3 = vector.load %arg4[%c0_3, %c0_4] : memref<1x128xf32, #tpu.memory_space<vmem>>, vector<1x128xf32>
    %4 = vector.broadcast %3 : vector<1x128xf32> to vector<19x128xf32>
    %5 = arith.addf %2, %4 : vector<19x128xf32>
    %cst_5 = arith.constant 0.000000e+00 : f32
    %6 = vector.broadcast %cst_5 : f32 to vector<19x128xf32>
    %7 = arith.maximumf %5, %6 : vector<19x128xf32>
    %8 = arith.truncf %7 : vector<19x128xf32> to vector<19x128xbf16>
    %c0_6 = arith.constant 0 : index
    %c0_7 = arith.constant 0 : index
    %9 = vector.load %arg5[%c0_6, %c0_7] : memref<128x128xbf16, #tpu.memory_space<vmem>>, vector<128x128xbf16>
    %cst_8 = arith.constant dense<0.000000e+00> : vector<19x128xf32>
    %10 = tpu.matmul %8, %9, %cst_8 {dimension_numbers = #tpu.dot_dimension_numbers<[1], [0], [0], [1], [0, 0, 1, 1], [], []>} : vector<19x128xbf16>, vector<128x128xbf16>, vector<19x128xf32> -> vector<19x128xf32>
    %c0_9 = arith.constant 0 : index
    %c0_10 = arith.constant 0 : index
    %11 = vector.load %arg2[%c0_9, %c0_10] : memref<19x128xf32, #tpu.memory_space<vmem>>, vector<19x128xf32>
    %c0_11 = arith.constant 0 : index
    %c0_12 = arith.constant 0 : index
    %12 = vector.load %arg6[%c0_11, %c0_12] : memref<1x128xf32, #tpu.memory_space<vmem>>, vector<1x128xf32>
    %13 = vector.broadcast %12 : vector<1x128xf32> to vector<19x128xf32>
    %14 = arith.addf %10, %13 : vector<19x128xf32>
    %15 = arith.addf %11, %14 : vector<19x128xf32>
    %c0_13 = arith.constant 0 : index
    %c0_14 = arith.constant 0 : index
    %16 = vector.load %arg7[%c0_13, %c0_14] : memref<19x128xf32, #tpu.memory_space<vmem>>, vector<19x128xf32>
    tpu.vector_store %arg7[%c0_13, %c0_14], %15 {strides = array<i32>} : memref<19x128xf32, #tpu.memory_space<vmem>>, vector<19x128xf32>,
    return
  }
  func.func @transform_0(%arg0: i32) -> (i32, i32) {
    %c0_i32 = arith.constant 0 : i32
    %c0_i32_0 = arith.constant 0 : i32
    return %arg0, %c0_i32 : i32, i32
  }
  func.func @transform_1(%arg0: i32) -> (i32, i32) {
    %c0_i32 = arith.constant 0 : i32
    %c0_i32_0 = arith.constant 0 : i32
    return %arg0, %c0_i32 : i32, i32
  }
  func.func @transform_2(%arg0: i32) -> (i32, i32) {
    %c0_i32 = arith.constant 0 : i32
    %c0_i32_0 = arith.constant 0 : i32
    %c0_i32_1 = arith.constant 0 : i32
    return %c0_i32, %c0_i32_0 : i32, i32
  }
  func.func @transform_3(%arg0: i32) -> (i32, i32) {
    %c0_i32 = arith.constant 0 : i32
    %c0_i32_0 = arith.constant 0 : i32
    %c0_i32_1 = arith.constant 0 : i32
    return %c0_i32, %c0_i32_0 : i32, i32
  }
  func.func @transform_4(%arg0: i32) -> (i32, i32) {
    %c0_i32 = arith.constant 0 : i32
    %c0_i32_0 = arith.constant 0 : i32
    %c0_i32_1 = arith.constant 0 : i32
    return %c0_i32, %c0_i32_0 : i32, i32
  }
  func.func @transform_5(%arg0: i32) -> (i32, i32) {
    %c0_i32 = arith.constant 0 : i32
    %c0_i32_0 = arith.constant 0 : i32
    %c0_i32_1 = arith.constant 0 : i32
    return %c0_i32, %c0_i32_0 : i32, i32
  }
  func.func @transform_6(%arg0: i32) -> (i32, i32) {
    %c0_i32 = arith.constant 0 : i32
    %c0_i32_0 = arith.constant 0 : i32
    return %arg0, %c0_i32 : i32, i32
  }
}

module attributes {stable_mosaic.version = 11 : i64} {
  func.func @_embed_add_kernel(%arg0: i32, %arg1: memref<16x12xf32, #tpu.memory_space<vmem>>, %arg2: memref<16x128xf32, #tpu.memory_space<vmem>>, %arg3: memref<12x128xf32, #tpu.memory_space<vmem>>, %arg4: memref<1x128xf32, #tpu.memory_space<vmem>>, %arg5: memref<128x128xbf16, #tpu.memory_space<vmem>>, %arg6: memref<1x128xf32, #tpu.memory_space<vmem>>, %arg7: memref<16x128xf32, #tpu.memory_space<vmem>>) attributes {dimension_semantics = [#tpu.dimension_semantics<parallel>], iteration_bounds = array<i64: 1>, scalar_prefetch = 0 : i64, scratch_operands = 0 : i64, tpu.core_type = #tpu.core_type<tc>, window_params = [{transform_indices = @transform_0, window_bounds = array<i64: 16, 12>}, {transform_indices = @transform_1, window_bounds = array<i64: 16, 128>}, {pipeline_mode = #tpu.pipeline_mode<synchronous>, transform_indices = @transform_2, window_bounds = array<i64: 12, 128>}, {pipeline_mode = #tpu.pipeline_mode<synchronous>, transform_indices = @transform_3, window_bounds = array<i64: 1, 128>}, {pipeline_mode = #tpu.pipeline_mode<synchronous>, transform_indices = @transform_4, window_bounds = array<i64: 128, 128>}, {pipeline_mode = #tpu.pipeline_mode<synchronous>, transform_indices = @transform_5, window_bounds = array<i64: 1, 128>}, {transform_indices = @transform_6, window_bounds = array<i64: 16, 128>}]} {
    %c0 = arith.constant 0 : index
    %c0_0 = arith.constant 0 : index
    %0 = vector.load %arg1[%c0, %c0_0] : memref<16x12xf32, #tpu.memory_space<vmem>>, vector<16x12xf32>
    %c0_1 = arith.constant 0 : index
    %c0_2 = arith.constant 0 : index
    %1 = vector.load %arg3[%c0_1, %c0_2] : memref<12x128xf32, #tpu.memory_space<vmem>>, vector<12x128xf32>
    %cst = arith.constant dense<0.000000e+00> : vector<16x128xf32>
    %2 = tpu.matmul %0, %1, %cst {dimension_numbers = #tpu.dot_dimension_numbers<[1], [0], [0], [1], [0, 0, 1, 1], [], []>} : vector<16x12xf32>, vector<12x128xf32>, vector<16x128xf32> -> vector<16x128xf32>
    %c0_3 = arith.constant 0 : index
    %c0_4 = arith.constant 0 : index
    %3 = vector.load %arg4[%c0_3, %c0_4] : memref<1x128xf32, #tpu.memory_space<vmem>>, vector<1x128xf32>
    %4 = vector.broadcast %3 : vector<1x128xf32> to vector<16x128xf32>
    %5 = arith.addf %2, %4 : vector<16x128xf32>
    %cst_5 = arith.constant 0.000000e+00 : f32
    %6 = vector.broadcast %cst_5 : f32 to vector<16x128xf32>
    %7 = arith.maximumf %5, %6 : vector<16x128xf32>
    %8 = arith.truncf %7 : vector<16x128xf32> to vector<16x128xbf16>
    %c0_6 = arith.constant 0 : index
    %c0_7 = arith.constant 0 : index
    %9 = vector.load %arg5[%c0_6, %c0_7] : memref<128x128xbf16, #tpu.memory_space<vmem>>, vector<128x128xbf16>
    %cst_8 = arith.constant dense<0.000000e+00> : vector<16x128xf32>
    %10 = tpu.matmul %8, %9, %cst_8 {dimension_numbers = #tpu.dot_dimension_numbers<[1], [0], [0], [1], [0, 0, 1, 1], [], []>} : vector<16x128xbf16>, vector<128x128xbf16>, vector<16x128xf32> -> vector<16x128xf32>
    %c0_9 = arith.constant 0 : index
    %c0_10 = arith.constant 0 : index
    %11 = vector.load %arg2[%c0_9, %c0_10] : memref<16x128xf32, #tpu.memory_space<vmem>>, vector<16x128xf32>
    %c0_11 = arith.constant 0 : index
    %c0_12 = arith.constant 0 : index
    %12 = vector.load %arg6[%c0_11, %c0_12] : memref<1x128xf32, #tpu.memory_space<vmem>>, vector<1x128xf32>
    %13 = vector.broadcast %12 : vector<1x128xf32> to vector<16x128xf32>
    %14 = arith.addf %10, %13 : vector<16x128xf32>
    %15 = arith.addf %11, %14 : vector<16x128xf32>
    %c0_13 = arith.constant 0 : index
    %c0_14 = arith.constant 0 : index
    %16 = vector.load %arg7[%c0_13, %c0_14] : memref<16x128xf32, #tpu.memory_space<vmem>>, vector<16x128xf32>
    tpu.vector_store %arg7[%c0_13, %c0_14], %15 {strides = array<i32>} : memref<16x128xf32, #tpu.memory_space<vmem>>, vector<16x128xf32>,
    return
  }
  func.func @transform_0(%arg0: i32) -> (i32, i32) {
    %c0_i32 = arith.constant 0 : i32
    %c0_i32_0 = arith.constant 0 : i32
    return %arg0, %c0_i32 : i32, i32
  }
  func.func @transform_1(%arg0: i32) -> (i32, i32) {
    %c0_i32 = arith.constant 0 : i32
    %c0_i32_0 = arith.constant 0 : i32
    return %arg0, %c0_i32 : i32, i32
  }
  func.func @transform_2(%arg0: i32) -> (i32, i32) {
    %c0_i32 = arith.constant 0 : i32
    %c0_i32_0 = arith.constant 0 : i32
    %c0_i32_1 = arith.constant 0 : i32
    return %c0_i32, %c0_i32_0 : i32, i32
  }
  func.func @transform_3(%arg0: i32) -> (i32, i32) {
    %c0_i32 = arith.constant 0 : i32
    %c0_i32_0 = arith.constant 0 : i32
    %c0_i32_1 = arith.constant 0 : i32
    return %c0_i32, %c0_i32_0 : i32, i32
  }
  func.func @transform_4(%arg0: i32) -> (i32, i32) {
    %c0_i32 = arith.constant 0 : i32
    %c0_i32_0 = arith.constant 0 : i32
    %c0_i32_1 = arith.constant 0 : i32
    return %c0_i32, %c0_i32_0 : i32, i32
  }
  func.func @transform_5(%arg0: i32) -> (i32, i32) {
    %c0_i32 = arith.constant 0 : i32
    %c0_i32_0 = arith.constant 0 : i32
    %c0_i32_1 = arith.constant 0 : i32
    return %c0_i32, %c0_i32_0 : i32, i32
  }
  func.func @transform_6(%arg0: i32) -> (i32, i32) {
    %c0_i32 = arith.constant 0 : i32
    %c0_i32_0 = arith.constant 0 : i32
    return %arg0, %c0_i32 : i32, i32
  }
}

</mosaic_0001>

<llo_original>
// kernel: pos_embedding_with_mask.3
$region0: #{pos_embedding_with_mask.3}
  #allocation0 [shape = 'u32[]', space=smem, size = 0x4, offset = 0x4, fixed_abs, tag = 'smem constant byte address 0x4 - core index']
  #allocation1 [shape = 'u32[144,128]{1,0:T(1,128)}', space=vmem, size = 0x12000, scoped, tag = 'internal scratch']
  %s0 = inlined_call_operand.vmem [shape: f32[19,4], index: 0, kind: input, shape index: {}]
  %s1 = inlined_call_operand.vmem [shape: f32[19,128], index: 1, kind: input, shape index: {}]
  %s2 = inlined_call_operand.vmem [shape: f32[4,128], index: 2, kind: input, shape index: {}]
  %s3 = inlined_call_operand.vmem [shape: f32[1,128], index: 3, kind: input, shape index: {}]
  %s4 = inlined_call_operand.vmem [shape: bf16[128,128], index: 4, kind: input, shape index: {}]
  %s5 = inlined_call_operand.vmem [shape: f32[1,128], index: 5, kind: input, shape index: {}]
  %s6 = inlined_call_operand.vmem [shape: f32[19,128], index: 6, kind: output, shape index: {}]
  %s7 = sld [smem:[#allocation0]]
  $region34: #{pos_embedding_with_mask.3} parent=0
    _
  %s9 = ssub.s32 1, %s7
  %s10 = scalar_select 0, %s9, %s7
  // Predicated region
  $region2: #{pos_embedding_with_mask.3} parent=0 // pred_check
    _
  $region3: #{pos_embedding_with_mask.3} parent=0 // pred_check_branch
    %12 = sbr.rel (0) target = $region5
  $region4: #{pos_embedding_with_mask.3} parent=0 // pred_region
    _
  $region5: #{pos_embedding_with_mask.3} parent=0 // pred_fallthru
    _
  // Predicated region
  $region6: #{pos_embedding_with_mask.3} parent=0 // pred_check
    _
  $region7: #{pos_embedding_with_mask.3} parent=0 // pred_check_branch
    %14 = sbr.rel (0) target = $region9
  $region8: #{pos_embedding_with_mask.3} parent=0 // pred_region
    _
  $region9: #{pos_embedding_with_mask.3} parent=0 // pred_fallthru
    _
  // Predicated region
  $region10: #{pos_embedding_with_mask.3} parent=0 // pred_check
    _
  $region11: #{pos_embedding_with_mask.3} parent=0 // pred_check_branch
    %16 = sbr.rel (0) target = $region13
  $region12: #{pos_embedding_with_mask.3} parent=0 // pred_region
    _
  $region13: #{pos_embedding_with_mask.3} parent=0 // pred_fallthru
    _
  // Predicated region
  $region14: #{pos_embedding_with_mask.3} parent=0 // pred_check
    _
  $region15: #{pos_embedding_with_mask.3} parent=0 // pred_check_branch
    %18 = sbr.rel (0) target = $region17
  $region16: #{pos_embedding_with_mask.3} parent=0 // pred_region
    _
  $region17: #{pos_embedding_with_mask.3} parent=0 // pred_fallthru
    _
  // Predicated region
  $region18: #{pos_embedding_with_mask.3} parent=0 // pred_check
    _
  $region19: #{pos_embedding_with_mask.3} parent=0 // pred_check_branch
    %20 = sbr.rel (0) target = $region21
  $region20: #{pos_embedding_with_mask.3} parent=0 // pred_region
    _
  $region21: #{pos_embedding_with_mask.3} parent=0 // pred_fallthru
    _
  // Predicated region
  $region22: #{pos_embedding_with_mask.3} parent=0 // pred_check
    _
  $region23: #{pos_embedding_with_mask.3} parent=0 // pred_check_branch
    %22 = sbr.rel (0) target = $region25
  $region24: #{pos_embedding_with_mask.3} parent=0 // pred_region
    _
  $region25: #{pos_embedding_with_mask.3} parent=0 // pred_fallthru
    _
  %v24 = vld [vmem:[%s0] sm:$0xff]
  %v25 = vld [vmem:[%s0 + $0x8] sm:$0xff]
  %v26 = vld [vmem:[%s0 + $0x10] sm:$0x7]
  %v27 = vld [vmem:[%s2] sm:$0xf]
  %v28 = vld [vmem:[%s3] sm:$0x1]
  %v30 = vlaneseq
  %v31 = vshrl.u32 %v30, 7
  %v32 = vsub.s32 0, %v31
  %v33 = vrot.slane %v28, %v32
  %vm35 = vcmask 31744
  %v37 = vsel %vm35, %v24, 0
  %v40 = vsel %vm35, %v25, 0
  %v43 = vsel %vm35, %v26, 0
  %vm45 = vcmask 1043456
  %v47 = vsel %vm45, %v27, 0
  %49 = vmatprep.subr.mxu0 0.0
  %50 = vmatpush1.msra.mxu0 %v47
  %51 = vmatprep.subr.mxu0 0.0
  %52 = vmatpush1.msra.mxu0 0.0
  %53 = vmatprep.subr.mxu0 0.0
  %54 = vmatpush1.msra.mxu0 0.0
  %55 = vmatprep.subr.mxu0 0.0
  %56 = vmatpush1.msra.mxu0 0.0
  %57 = vmatprep.subr.mxu0 0.0
  %58 = vmatpush1.msra.mxu0 0.0
  %59 = vmatprep.subr.mxu0 0.0
  %60 = vmatpush1.msra.mxu0 0.0
  %61 = vmatprep.subr.mxu0 0.0
  %62 = vmatpush1.msra.mxu0 0.0
  %63 = vmatprep.subr.mxu0 0.0
  %64 = vmatpush1.msra.mxu0 0.0
  %65 = vmatprep.subr.mxu0 0.0
  %66 = vmatpush1.msra.mxu0 0.0
  %67 = vmatprep.subr.mxu0 0.0
  %68 = vmatpush1.msra.mxu0 0.0
  %69 = vmatprep.subr.mxu0 0.0
  %70 = vmatpush1.msra.mxu0 0.0
  %71 = vmatprep.subr.mxu0 0.0
  %72 = vmatpush1.msra.mxu0 0.0
  %73 = vmatprep.subr.mxu0 0.0
  %74 = vmatpush1.msra.mxu0 0.0
  %75 = vmatprep.subr.mxu0 0.0
  %76 = vmatpush1.msra.mxu0 0.0
  %77 = vmatprep.subr.mxu0 0.0
  %78 = vmatpush1.msra.mxu0 0.0
  %79 = vmatprep.subr.mxu0 0.0
  %80 = vmatpush1.msra.mxu0 0.0
  %81 = vmatprep.subr.mxu0 0.0
  %82 = vmatpush1.msra.mxu0 0.0
  %83 = vmatprep.subr.mxu0 0.0
  %84 = vmatpush1.msra.mxu0 0.0
  %85 = vmatprep.subr.mxu0 0.0
  %86 = vmatpush1.msra.mxu0 0.0
  %87 = vmatprep.subr.mxu0 0.0
  %88 = vmatpush1.msra.mxu0 0.0
  %89 = vmatprep.subr.mxu0 0.0
  %90 = vmatpush1.msra.mxu0 0.0
  %91 = vmatprep.subr.mxu0 0.0
  %92 = vmatpush1.msra.mxu0 0.0
  %93 = vmatprep.subr.mxu0 0.0
  %94 = vmatpush1.msra.mxu0 0.0
  %95 = vmatprep.subr.mxu0 0.0
  %96 = vmatpush1.msra.mxu0 0.0
  %97 = vmatprep.subr.mxu0 0.0
  %98 = vmatpush1.msra.mxu0 0.0
  %99 = vmatprep.subr.mxu0 0.0
  %100 = vmatpush1.msra.mxu0 0.0
  %101 = vmatprep.subr.mxu0 0.0
  %102 = vmatpush1.msra.mxu0 0.0
  %103 = vmatprep.subr.mxu0 0.0
  %104 = vmatpush1.msra.mxu0 0.0
  %105 = vmatprep.subr.mxu0 0.0
  %106 = vmatpush1.msra.mxu0 0.0
  %107 = vmatprep.subr.mxu0 0.0
  %108 = vmatpush1.msra.mxu0 0.0
  %109 = vmatprep.subr.mxu0 0.0
  %110 = vmatpush1.msra.mxu0 0.0
  %111 = vmatprep.subr.mxu0 0.0
  %112 = vmatpush1.msra.mxu0 0.0
  %113 = vmatprep.mubr.f32.mxu0 0.0
  %114 = vmatmul.mubr.f32.gmra.mrb[0].mxu0 %v37
  %v115 = vpop.f32.mrb[0].mxu0
  %v116 = vadd.f32 %v33, %v115
  %v117 = vpop.f32.mrb[0].mxu0
  %118 = vmatprep.mubr.f32.mxu0 0.0
  %119 = vmatmul.mubr.f32.gmra.mrb[0].mxu0 %v40
  %v120 = vpop.f32.mrb[0].mxu0
  %v121 = vadd.f32 %v33, %v120
  %v122 = vpop.f32.mrb[0].mxu0
  %123 = vmatprep.mubr.f32.mxu0 0.0
  %124 = vmatmul.mubr.f32.gmra.mrb[0].mxu0 %v43
  %v125 = vpop.f32.mrb[0].mxu0
  %v126 = vadd.f32 %v33, %v125
  %v127 = vpop.f32.mrb[0].mxu0
  %128 = vdwg.mxu0
  %v129 = vmax.f32 %v116, 0.0
  %v130 = vmax.f32 %v121, 0.0
  %v131 = vmax.f32 %v126, 0.0
  %v132 = vpack.c.bf16 %v130, %v129
  %v133 = vpack.c.bf16 %v131, %v131
  %v134 = vld [vmem:[%s4] sm:$0xf]
  %v135 = vld [vmem:[%s4 + $0x4] sm:$0xf]
  %v136 = vld [vmem:[%s4 + $0x8] sm:$0xf]
  %v137 = vld [vmem:[%s4 + $0xc] sm:$0xf]
  %v138 = vld [vmem:[%s4 + $0x10] sm:$0xf]
  %v139 = vld [vmem:[%s4 + $0x14] sm:$0xf]
  %v140 = vld [vmem:[%s4 + $0x18] sm:$0xf]
  %v141 = vld [vmem:[%s4 + $0x1c] sm:$0xf]
  %v142 = vld [vmem:[%s4 + $0x20] sm:$0xf]
  %v143 = vld [vmem:[%s4 + $0x24] sm:$0xf]
  %v144 = vld [vmem:[%s4 + $0x28] sm:$0xf]
  %v145 = vld [vmem:[%s4 + $0x2c] sm:$0xf]
  %v146 = vld [vmem:[%s4 + $0x30] sm:$0xf]
  %v147 = vld [vmem:[%s4 + $0x34] sm:$0xf]
  %v148 = vld [vmem:[%s4 + $0x38] sm:$0xf]
  %v149 = vld [vmem:[%s4 + $0x3c] sm:$0xf]
  %v150 = vld [vmem:[%s1] sm:$0xff]
  %v151 = vld [vmem:[%s1 + $0x8] sm:$0xff]
  %v152 = vld [vmem:[%s1 + $0x10] sm:$0x7]
  %v153 = vld [vmem:[%s5] sm:$0x1]
  %v155 = vlaneseq
  %v156 = vshrl.u32 %v155, 7
  %v157 = vsub.s32 0, %v156
  %v158 = vrot.slane %v153, %v157
  %v176 = vunpack.c.l.b16 %v134
  %v177 = vunpack.c.l.b16 %v135
  %v178 = vunpack.c.l.b16 %v136
  %v179 = vunpack.c.l.b16 %v137
  %v180 = vunpack.c.l.b16 %v138
  %v181 = vunpack.c.l.b16 %v139
  %v182 = vunpack.c.l.b16 %v140
  %v183 = vunpack.c.l.b16 %v141
  %v184 = vunpack.c.l.b16 %v142
  %v185 = vunpack.c.l.b16 %v143
  %v186 = vunpack.c.l.b16 %v144
  %v187 = vunpack.c.l.b16 %v145
  %v188 = vunpack.c.l.b16 %v146
  %v189 = vunpack.c.l.b16 %v147
  %v190 = vunpack.c.l.b16 %v148
  %v191 = vunpack.c.l.b16 %v149
  %v192 = vpack.c.b16 %v177, %v176
  %v193 = vpack.c.b16 %v179, %v178
  %v194 = vpack.c.b16 %v181, %v180
  %v195 = vpack.c.b16 %v183, %v182
  %v196 = vpack.c.b16 %v185, %v184
  %v197 = vpack.c.b16 %v187, %v186
  %v198 = vpack.c.b16 %v189, %v188
  %v199 = vpack.c.b16 %v191, %v190
  %208 = vmatprep.subr.bf16.mxu0 0
  %209 = vmatpush1.bf16.msra.mxu0 %v192
  %210 = vmatprep.subr.bf16.mxu0 0
  %211 = vmatpush1.bf16.msra.mxu0 %v193
  %212 = vmatprep.subr.bf16.mxu0 0
  %213 = vmatpush1.bf16.msra.mxu0 %v194
  %214 = vmatprep.subr.bf16.mxu0 0
  %215 = vmatpush1.bf16.msra.mxu0 %v195
  %216 = vmatprep.subr.bf16.mxu0 0
  %217 = vmatpush1.bf16.msra.mxu0 %v196
  %218 = vmatprep.subr.bf16.mxu0 0
  %219 = vmatpush1.bf16.msra.mxu0 %v197
  %220 = vmatprep.subr.bf16.mxu0 0
  %221 = vmatpush1.bf16.msra.mxu0 %v198
  %222 = vmatprep.subr.bf16.mxu0 0
  %223 = vmatpush1.bf16.msra.mxu0 %v199
  %224 = vmatprep.subr.bf16.mxu0 0
  %225 = vmatpush1.bf16.msra.mxu0 0
  %226 = vmatprep.subr.bf16.mxu0 0
  %227 = vmatpush1.bf16.msra.mxu0 0
  %228 = vmatprep.subr.bf16.mxu0 0
  %229 = vmatpush1.bf16.msra.mxu0 0
  %230 = vmatprep.subr.bf16.mxu0 0
  %231 = vmatpush1.bf16.msra.mxu0 0
  %232 = vmatprep.subr.bf16.mxu0 0
  %233 = vmatpush1.bf16.msra.mxu0 0
  %234 = vmatprep.subr.bf16.mxu0 0
  %235 = vmatpush1.bf16.msra.mxu0 0
  %236 = vmatprep.subr.bf16.mxu0 0
  %237 = vmatpush1.bf16.msra.mxu0 0
  %238 = vmatprep.subr.bf16.mxu0 0
  %239 = vmatpush1.bf16.msra.mxu0 0
  %240 = vmatprep.mubr.bf16.mxu0 0
  %241 = vmatmul.mubr.bf16.gmra.mrb[0].mxu0 %v132
  %v242 = vpop.f32.mrb[0].mxu0
  %v243 = vadd.f32 %v158, %v242
  %v244 = vpop.f32.mrb[0].mxu0
  %v245 = vpop.f32.mrb[0].mxu0
  %v246 = vadd.f32 %v158, %v245
  %v247 = vpop.f32.mrb[0].mxu0
  %248 = vmatprep.mubr.bf16.mxu0 0
  %249 = vmatmul.mubr.bf16.gmra.mrb[0].mxu0 %v133
  %v250 = vpop.f32.mrb[0].mxu0
  %v251 = vadd.f32 %v158, %v250
  %v252 = vpop.f32.mrb[0].mxu0
  %v253 = vpop.f32.mrb[0].mxu0
  %v254 = vpop.f32.mrb[0].mxu0
  %255 = vdwg.mxu0
  %v256 = vadd.f32 %v150, %v243
  %v257 = vadd.f32 %v151, %v246
  %v258 = vadd.f32 %v152, %v251
  %259 = vst [vmem:[%s6] sm:$0xff] %v256
  %260 = vst [vmem:[%s6 + $0x8] sm:$0xff] %v257
  %261 = vst [vmem:[%s6 + $0x10] sm:$0x7] %v258
  // Predicated region
  $region26: #{pos_embedding_with_mask.3} parent=0 // pred_check
    _
  $region27: #{pos_embedding_with_mask.3} parent=0 // pred_check_branch
    %263 = sbr.rel (0) target = $region29
  $region28: #{pos_embedding_with_mask.3} parent=0 // pred_region
    _
  $region29: #{pos_embedding_with_mask.3} parent=0 // pred_fallthru
    _
  // Predicated region
  $region30: #{pos_embedding_with_mask.3} parent=0 // pred_check
    _
  $region31: #{pos_embedding_with_mask.3} parent=0 // pred_check_branch
    %265 = sbr.rel (0) target = $region33
  $region32: #{pos_embedding_with_mask.3} parent=0 // pred_region
    _
  $region33: #{pos_embedding_with_mask.3} parent=0 // pred_fallthru
    _

// kernel: pos_embedding_with_mask.2
$region0: #{pos_embedding_with_mask.2}
  #allocation0 [shape = 'u32[]', space=smem, size = 0x4, offset = 0x4, fixed_abs, tag = 'smem constant byte address 0x4 - core index']
  #allocation1 [shape = 'u32[144,128]{1,0:T(1,128)}', space=vmem, size = 0x12000, scoped, tag = 'internal scratch']
  %s0 = inlined_call_operand.vmem [shape: f32[16,12], index: 0, kind: input, shape index: {}]
  %s1 = inlined_call_operand.vmem [shape: f32[16,128], index: 1, kind: input, shape index: {}]
  %s2 = inlined_call_operand.vmem [shape: f32[12,128], index: 2, kind: input, shape index: {}]
  %s3 = inlined_call_operand.vmem [shape: f32[1,128], index: 3, kind: input, shape index: {}]
  %s4 = inlined_call_operand.vmem [shape: bf16[128,128], index: 4, kind: input, shape index: {}]
  %s5 = inlined_call_operand.vmem [shape: f32[1,128], index: 5, kind: input, shape index: {}]
  %s6 = inlined_call_operand.vmem [shape: f32[16,128], index: 6, kind: output, shape index: {}]
  %s7 = sld [smem:[#allocation0]]
  $region34: #{pos_embedding_with_mask.2} parent=0
    _
  %s9 = ssub.s32 1, %s7
  %s10 = scalar_select 0, %s9, %s7
  // Predicated region
  $region2: #{pos_embedding_with_mask.2} parent=0 // pred_check
    _
  $region3: #{pos_embedding_with_mask.2} parent=0 // pred_check_branch
    %12 = sbr.rel (0) target = $region5
  $region4: #{pos_embedding_with_mask.2} parent=0 // pred_region
    _
  $region5: #{pos_embedding_with_mask.2} parent=0 // pred_fallthru
    _
  // Predicated region
  $region6: #{pos_embedding_with_mask.2} parent=0 // pred_check
    _
  $region7: #{pos_embedding_with_mask.2} parent=0 // pred_check_branch
    %14 = sbr.rel (0) target = $region9
  $region8: #{pos_embedding_with_mask.2} parent=0 // pred_region
    _
  $region9: #{pos_embedding_with_mask.2} parent=0 // pred_fallthru
    _
  // Predicated region
  $region10: #{pos_embedding_with_mask.2} parent=0 // pred_check
    _
  $region11: #{pos_embedding_with_mask.2} parent=0 // pred_check_branch
    %16 = sbr.rel (0) target = $region13
  $region12: #{pos_embedding_with_mask.2} parent=0 // pred_region
    _
  $region13: #{pos_embedding_with_mask.2} parent=0 // pred_fallthru
    _
  // Predicated region
  $region14: #{pos_embedding_with_mask.2} parent=0 // pred_check
    _
  $region15: #{pos_embedding_with_mask.2} parent=0 // pred_check_branch
    %18 = sbr.rel (0) target = $region17
  $region16: #{pos_embedding_with_mask.2} parent=0 // pred_region
    _
  $region17: #{pos_embedding_with_mask.2} parent=0 // pred_fallthru
    _
  // Predicated region
  $region18: #{pos_embedding_with_mask.2} parent=0 // pred_check
    _
  $region19: #{pos_embedding_with_mask.2} parent=0 // pred_check_branch
    %20 = sbr.rel (0) target = $region21
  $region20: #{pos_embedding_with_mask.2} parent=0 // pred_region
    _
  $region21: #{pos_embedding_with_mask.2} parent=0 // pred_fallthru
    _
  // Predicated region
  $region22: #{pos_embedding_with_mask.2} parent=0 // pred_check
    _
  $region23: #{pos_embedding_with_mask.2} parent=0 // pred_check_branch
    %22 = sbr.rel (0) target = $region25
  $region24: #{pos_embedding_with_mask.2} parent=0 // pred_region
    _
  $region25: #{pos_embedding_with_mask.2} parent=0 // pred_fallthru
    _
  %v24 = vld [vmem:[%s0] sm:$0xff]
  %v25 = vld [vmem:[%s0 + $0x8] sm:$0xff]
  %v26 = vld [vmem:[%s2] sm:$0xff]
  %v27 = vld [vmem:[%s2 + $0x8] sm:$0xf]
  %v28 = vld [vmem:[%s3] sm:$0x1]
  %v30 = vlaneseq
  %v31 = vshrl.u32 %v30, 7
  %v32 = vsub.s32 0, %v31
  %v33 = vrot.slane %v28, %v32
  %vm35 = vcmask 97280
  %v37 = vsel %vm35, %v24, 0
  %v40 = vsel %vm35, %v25, 0
  %vm42 = vcmask 1043456
  %v44 = vsel %vm42, %v27, 0
  %46 = vmatprep.subr.mxu0 0.0
  %47 = vmatpush1.msra.mxu0 %v26
  %48 = vmatprep.subr.mxu0 0.0
  %49 = vmatpush1.msra.mxu0 %v44
  %50 = vmatprep.subr.mxu0 0.0
  %51 = vmatpush1.msra.mxu0 0.0
  %52 = vmatprep.subr.mxu0 0.0
  %53 = vmatpush1.msra.mxu0 0.0
  %54 = vmatprep.subr.mxu0 0.0
  %55 = vmatpush1.msra.mxu0 0.0
  %56 = vmatprep.subr.mxu0 0.0
  %57 = vmatpush1.msra.mxu0 0.0
  %58 = vmatprep.subr.mxu0 0.0
  %59 = vmatpush1.msra.mxu0 0.0
  %60 = vmatprep.subr.mxu0 0.0
  %61 = vmatpush1.msra.mxu0 0.0
  %62 = vmatprep.subr.mxu0 0.0
  %63 = vmatpush1.msra.mxu0 0.0
  %64 = vmatprep.subr.mxu0 0.0
  %65 = vmatpush1.msra.mxu0 0.0
  %66 = vmatprep.subr.mxu0 0.0
  %67 = vmatpush1.msra.mxu0 0.0
  %68 = vmatprep.subr.mxu0 0.0
  %69 = vmatpush1.msra.mxu0 0.0
  %70 = vmatprep.subr.mxu0 0.0
  %71 = vmatpush1.msra.mxu0 0.0
  %72 = vmatprep.subr.mxu0 0.0
  %73 = vmatpush1.msra.mxu0 0.0
  %74 = vmatprep.subr.mxu0 0.0
  %75 = vmatpush1.msra.mxu0 0.0
  %76 = vmatprep.subr.mxu0 0.0
  %77 = vmatpush1.msra.mxu0 0.0
  %78 = vmatprep.subr.mxu0 0.0
  %79 = vmatpush1.msra.mxu0 0.0
  %80 = vmatprep.subr.mxu0 0.0
  %81 = vmatpush1.msra.mxu0 0.0
  %82 = vmatprep.subr.mxu0 0.0
  %83 = vmatpush1.msra.mxu0 0.0
  %84 = vmatprep.subr.mxu0 0.0
  %85 = vmatpush1.msra.mxu0 0.0
  %86 = vmatprep.subr.mxu0 0.0
  %87 = vmatpush1.msra.mxu0 0.0
  %88 = vmatprep.subr.mxu0 0.0
  %89 = vmatpush1.msra.mxu0 0.0
  %90 = vmatprep.subr.mxu0 0.0
  %91 = vmatpush1.msra.mxu0 0.0
  %92 = vmatprep.subr.mxu0 0.0
  %93 = vmatpush1.msra.mxu0 0.0
  %94 = vmatprep.subr.mxu0 0.0
  %95 = vmatpush1.msra.mxu0 0.0
  %96 = vmatprep.subr.mxu0 0.0
  %97 = vmatpush1.msra.mxu0 0.0
  %98 = vmatprep.subr.mxu0 0.0
  %99 = vmatpush1.msra.mxu0 0.0
  %100 = vmatprep.subr.mxu0 0.0
  %101 = vmatpush1.msra.mxu0 0.0
  %102 = vmatprep.subr.mxu0 0.0
  %103 = vmatpush1.msra.mxu0 0.0
  %104 = vmatprep.subr.mxu0 0.0
  %105 = vmatpush1.msra.mxu0 0.0
  %106 = vmatprep.subr.mxu0 0.0
  %107 = vmatpush1.msra.mxu0 0.0
  %108 = vmatprep.subr.mxu0 0.0
  %109 = vmatpush1.msra.mxu0 0.0
  %110 = vmatprep.mubr.f32.mxu0 0.0
  %111 = vmatmul.mubr.f32.gmra.mrb[0].mxu0 %v37
  %v112 = vpop.f32.mrb[0].mxu0
  %v113 = vadd.f32 %v33, %v112
  %v114 = vpop.f32.mrb[0].mxu0
  %115 = vmatprep.mubr.f32.mxu0 0.0
  %116 = vmatmul.mubr.f32.gmra.mrb[0].mxu0 %v40
  %v117 = vpop.f32.mrb[0].mxu0
  %v118 = vadd.f32 %v33, %v117
  %v119 = vpop.f32.mrb[0].mxu0
  %120 = vdwg.mxu0
  %v121 = vmax.f32 %v113, 0.0
  %v122 = vmax.f32 %v118, 0.0
  %v123 = vpack.c.bf16 %v122, %v121
  %v124 = vld [vmem:[%s4] sm:$0xf]
  %v125 = vld [vmem:[%s4 + $0x4] sm:$0xf]
  %v126 = vld [vmem:[%s4 + $0x8] sm:$0xf]
  %v127 = vld [vmem:[%s4 + $0xc] sm:$0xf]
  %v128 = vld [vmem:[%s4 + $0x10] sm:$0xf]
  %v129 = vld [vmem:[%s4 + $0x14] sm:$0xf]
  %v130 = vld [vmem:[%s4 + $0x18] sm:$0xf]
  %v131 = vld [vmem:[%s4 + $0x1c] sm:$0xf]
  %v132 = vld [vmem:[%s4 + $0x20] sm:$0xf]
  %v133 = vld [vmem:[%s4 + $0x24] sm:$0xf]
  %v134 = vld [vmem:[%s4 + $0x28] sm:$0xf]
  %v135 = vld [vmem:[%s4 + $0x2c] sm:$0xf]
  %v136 = vld [vmem:[%s4 + $0x30] sm:$0xf]
  %v137 = vld [vmem:[%s4 + $0x34] sm:$0xf]
  %v138 = vld [vmem:[%s4 + $0x38] sm:$0xf]
  %v139 = vld [vmem:[%s4 + $0x3c] sm:$0xf]
  %v140 = vld [vmem:[%s1] sm:$0xff]
  %v141 = vld [vmem:[%s1 + $0x8] sm:$0xff]
  %v142 = vld [vmem:[%s5] sm:$0x1]
  %v144 = vlaneseq
  %v145 = vshrl.u32 %v144, 7
  %v146 = vsub.s32 0, %v145
  %v147 = vrot.slane %v142, %v146
  %v165 = vunpack.c.l.b16 %v124
  %v166 = vunpack.c.l.b16 %v125
  %v167 = vunpack.c.l.b16 %v126
  %v168 = vunpack.c.l.b16 %v127
  %v169 = vunpack.c.l.b16 %v128
  %v170 = vunpack.c.l.b16 %v129
  %v171 = vunpack.c.l.b16 %v130
  %v172 = vunpack.c.l.b16 %v131
  %v173 = vunpack.c.l.b16 %v132
  %v174 = vunpack.c.l.b16 %v133
  %v175 = vunpack.c.l.b16 %v134
  %v176 = vunpack.c.l.b16 %v135
  %v177 = vunpack.c.l.b16 %v136
  %v178 = vunpack.c.l.b16 %v137
  %v179 = vunpack.c.l.b16 %v138
  %v180 = vunpack.c.l.b16 %v139
  %v181 = vpack.c.b16 %v166, %v165
  %v182 = vpack.c.b16 %v168, %v167
  %v183 = vpack.c.b16 %v170, %v169
  %v184 = vpack.c.b16 %v172, %v171
  %v185 = vpack.c.b16 %v174, %v173
  %v186 = vpack.c.b16 %v176, %v175
  %v187 = vpack.c.b16 %v178, %v177
  %v188 = vpack.c.b16 %v180, %v179
  %197 = vmatprep.subr.bf16.mxu0 0
  %198 = vmatpush1.bf16.msra.mxu0 %v181
  %199 = vmatprep.subr.bf16.mxu0 0
  %200 = vmatpush1.bf16.msra.mxu0 %v182
  %201 = vmatprep.subr.bf16.mxu0 0
  %202 = vmatpush1.bf16.msra.mxu0 %v183
  %203 = vmatprep.subr.bf16.mxu0 0
  %204 = vmatpush1.bf16.msra.mxu0 %v184
  %205 = vmatprep.subr.bf16.mxu0 0
  %206 = vmatpush1.bf16.msra.mxu0 %v185
  %207 = vmatprep.subr.bf16.mxu0 0
  %208 = vmatpush1.bf16.msra.mxu0 %v186
  %209 = vmatprep.subr.bf16.mxu0 0
  %210 = vmatpush1.bf16.msra.mxu0 %v187
  %211 = vmatprep.subr.bf16.mxu0 0
  %212 = vmatpush1.bf16.msra.mxu0 %v188
  %213 = vmatprep.subr.bf16.mxu0 0
  %214 = vmatpush1.bf16.msra.mxu0 0
  %215 = vmatprep.subr.bf16.mxu0 0
  %216 = vmatpush1.bf16.msra.mxu0 0
  %217 = vmatprep.subr.bf16.mxu0 0
  %218 = vmatpush1.bf16.msra.mxu0 0
  %219 = vmatprep.subr.bf16.mxu0 0
  %220 = vmatpush1.bf16.msra.mxu0 0
  %221 = vmatprep.subr.bf16.mxu0 0
  %222 = vmatpush1.bf16.msra.mxu0 0
  %223 = vmatprep.subr.bf16.mxu0 0
  %224 = vmatpush1.bf16.msra.mxu0 0
  %225 = vmatprep.subr.bf16.mxu0 0
  %226 = vmatpush1.bf16.msra.mxu0 0
  %227 = vmatprep.subr.bf16.mxu0 0
  %228 = vmatpush1.bf16.msra.mxu0 0
  %229 = vmatprep.mubr.bf16.mxu0 0
  %230 = vmatmul.mubr.bf16.gmra.mrb[0].mxu0 %v123
  %v231 = vpop.f32.mrb[0].mxu0
  %v232 = vadd.f32 %v147, %v231
  %v233 = vpop.f32.mrb[0].mxu0
  %v234 = vpop.f32.mrb[0].mxu0
  %v235 = vadd.f32 %v147, %v234
  %v236 = vpop.f32.mrb[0].mxu0
  %237 = vdwg.mxu0
  %v238 = vadd.f32 %v140, %v232
  %v239 = vadd.f32 %v141, %v235
  %240 = vst [vmem:[%s6] sm:$0xff] %v238
  %241 = vst [vmem:[%s6 + $0x8] sm:$0xff] %v239
  // Predicated region
  $region26: #{pos_embedding_with_mask.2} parent=0 // pred_check
    _
  $region27: #{pos_embedding_with_mask.2} parent=0 // pred_check_branch
    %243 = sbr.rel (0) target = $region29
  $region28: #{pos_embedding_with_mask.2} parent=0 // pred_region
    _
  $region29: #{pos_embedding_with_mask.2} parent=0 // pred_fallthru
    _
  // Predicated region
  $region30: #{pos_embedding_with_mask.2} parent=0 // pred_check
    _
  $region31: #{pos_embedding_with_mask.2} parent=0 // pred_check_branch
    %245 = sbr.rel (0) target = $region33
  $region32: #{pos_embedding_with_mask.2} parent=0 // pred_region
    _
  $region33: #{pos_embedding_with_mask.2} parent=0 // pred_fallthru
    _

</llo_original>
